<compile_context>
chip_gen: v7x
topology: tpu7x:2x2x1
jax: 0.10.0
libtpu: 0.0.40
codegen_flags: <defaults>
</compile_context>

<pallas_src>
import functools

import jax
import jax.numpy as jnp
from jax import lax
from jax.experimental import pallas as pl
from jax.experimental.pallas import tpu as pltpu


def _round_up(x, m):
    return (x + m - 1) // m * m


def _wbce_kernel(inputs_ref, target_ref, weights_ref, out_ref, *,
                 n_steps, row_tile, n_rows, needs_mask):
    p_id = pl.program_id(0)
    s_id = pl.program_id(1)

    @pl.when(s_id == 0)
    def _():
        out_ref[...] = jnp.zeros_like(out_ref)

    x = inputs_ref[...].astype(jnp.float32)          # (row_tile, C) probabilities
    t = target_ref[...].astype(jnp.float32)          # (row_tile, C) labels

    w0 = weights_ref[0:1, :]                         # (1, C), density pre-folded
    w1 = weights_ref[1:2, :]                         # (1, C)

    # Original semantics: weight is 0 unless target is exactly 0 or 1.
    w = jnp.where(t == 0.0, w0, 0.0)
    w = jnp.where(t == 1.0, w1, w)

    # One log per element: the other BCE term is always multiplied by zero.
    # PyTorch binary_cross_entropy clamps log terms at -100.
    prob = jnp.where(t == 1.0, x, 1.0 - x)
    loss = -w * jnp.maximum(jnp.log(prob), -100.0)   # (row_tile, C)

    if needs_mask:
        # Rows past N (partial last block / over-provisioned logical blocks)
        # contribute exactly 0; the where also scrubs any NaN/Inf from garbage
        # padding data before it reaches the accumulator.
        row_start = (p_id * n_steps + s_id) * row_tile
        row_ids = row_start + lax.broadcasted_iota(jnp.int32, loss.shape, 0)
        loss = jnp.where(row_ids < n_rows, loss, 0.0)

    # Elementwise accumulation into the resident (8, C) output block: the split
    # at a multiple of 8 keeps last dim intact (free reshape), and the axis-0
    # sum lowers to plain VPU adds — no cross-lane/sublane work in the hot loop.
    out_ref[...] += jnp.sum(loss.reshape(-1, 8, loss.shape[-1]), axis=0)


def weighted_bce(inputs, target, weights, density=None, *, row_tile=None):
    """inputs/target: (N, C); weights: (2, C); density: (C,), (1, C) or None.

    Returns the scalar f32 loss matching WeightedBinaryCrossEntropy1.forward.
    """
    N, C = inputs.shape
    assert target.shape == (N, C)
    assert weights.shape == (2, C)

    # Fold label density into the class weights once (tiny (2, C) op):
    #   (density * loss.mean(0)).sum() == (1/N) * sum_{n,c} density_c * loss_{n,c}
    # A non-tensor density (plain mean) is exactly the uniform density 1/C.
    if density is None:
        density = jnp.full((C,), 1.0 / C, dtype=jnp.float32)
    w_eff = weights.astype(jnp.float32) * jnp.asarray(density, jnp.float32).reshape(1, C)

    # Row tile: biggest that fits a conservative double-buffered VMEM budget
    # (~16 B / row-element across the two f32 streams, lane-padded), capped at
    # 2048 (>=512 rows already reaches ~85% of HBM roofline).
    if row_tile is None:
        c_vmem = _round_up(C, 128)
        budget_rows = (16 * 1024 * 1024) // (16 * c_vmem)
        row_tile = max(8, min(2048, (budget_rows // 8) * 8, _round_up(N, 8)))
    assert row_tile % 8 == 0

    num_row_blocks = pl.cdiv(N, row_tile)
    n_par = 2 if num_row_blocks >= 2 else 1   # feed both TCs on v7x; no-op on 1-TC chips
    n_steps = pl.cdiv(num_row_blocks, n_par)
    last_block = num_row_blocks - 1

    exact_cover = (n_par * n_steps == num_row_blocks)
    needs_mask = (N % row_tile != 0) or not exact_cover

    if exact_cover:
        def row_map(p, s):
            return (p * n_steps + s, 0)
    else:
        # Over-provisioned logical blocks are clamped onto the last real block
        # (always an in-bounds DMA); the in-kernel row mask (computed from the
        # *unclamped* logical index) zeroes their contribution.
        def row_map(p, s):
            return (jnp.minimum(p * n_steps + s, last_block), 0)

    kernel = functools.partial(
        _wbce_kernel,
        n_steps=n_steps, row_tile=row_tile, n_rows=N, needs_mask=needs_mask)

    out = pl.pallas_call(
        kernel,
        out_shape=jax.ShapeDtypeStruct((n_par * 8, C), jnp.float32),
        grid_spec=pltpu.PrefetchScalarGridSpec(
            num_scalar_prefetch=0,
            grid=(n_par, n_steps),
            in_specs=[
                pl.BlockSpec((row_tile, C), row_map),
                pl.BlockSpec((row_tile, C), row_map),
                pl.BlockSpec((2, C), lambda p, s: (0, 0)),      # stays resident
            ],
            out_specs=pl.BlockSpec((8, C), lambda p, s: (p, 0)),
        ),
        compiler_params=pltpu.CompilerParams(
            dimension_semantics=("parallel", "arbitrary"),
            vmem_limit_bytes=48 * 1024 * 1024,
        ),
    )(inputs, target, w_eff)

    # Single tiny epilogue reduction; divide by the true N (masked rows are 0).
    return jnp.sum(out) / N


def _reference(inputs, target, weights, density=None):
    # Pure-JAX reference of the PyTorch semantics (for sanity checking).
    p = inputs.astype(jnp.float32)
    t = target.astype(jnp.float32)
    w = jnp.where(t == 0.0, weights[0][None, :], 0.0)
    w = jnp.where(t == 1.0, weights[1][None, :], w)
    log_p = jnp.maximum(jnp.log(p), -100.0)
    log_1mp = jnp.maximum(jnp.log(1.0 - p), -100.0)
    loss = -w * (t * log_p + (1.0 - t) * log_1mp)
    if density is None:
        return jnp.mean(loss)
    return jnp.sum(jnp.asarray(density, jnp.float32).reshape(-1) * jnp.mean(loss, axis=0))


def _make_inputs(key, n, c):
    k1, k2, k3, k4 = jax.random.split(key, 4)
    inputs = jax.nn.sigmoid(jax.random.normal(k1, (n, c), dtype=jnp.float32))
    target = (jax.random.uniform(k2, (n, c)) > 0.5).astype(jnp.float32)
    weights = jax.random.uniform(k3, (2, c), minval=0.5, maxval=2.0, dtype=jnp.float32)
    density = jax.random.uniform(k4, (c,), minval=0.1, maxval=1.0, dtype=jnp.float32)
    density = density / jnp.sum(density)
    return inputs, target, weights, density


if __name__ == "__main__":
    key = jax.random.PRNGKey(0)
    k_a, k_b, k_c = jax.random.split(key, 3)

    # 1) Small shapes consistent with the module: batch=8, num_classes=32.
    inputs, target, weights, density = _make_inputs(k_a, 8, 32)
    loss = jax.block_until_ready(weighted_bce(inputs, target, weights, density))
    ref = _reference(inputs, target, weights, density)
    assert jnp.allclose(loss, ref, rtol=1e-5, atol=1e-5), (loss, ref)

    # 2) Gridded path: 2-core split, partial last row block (N=200 not a tile
    #    multiple), class dim not a multiple of 128, and some non-{0,1} targets
    #    (which must receive weight 0).
    inputs2, target2, weights2, density2 = _make_inputs(k_b, 200, 96)
    target2 = target2.at[3, 5].set(0.5).at[150, 90].set(0.25)
    loss2 = jax.block_until_ready(
        weighted_bce(inputs2, target2, weights2, density2, row_tile=64))
    ref2 = _reference(inputs2, target2, weights2, density2)
    assert jnp.allclose(loss2, ref2, rtol=1e-5, atol=1e-5), (loss2, ref2)

    # 3) Odd block count (3 blocks over 2 "cores"): exercises the clamped
    #    index_map + fully-masked logical block, plus the scalar-density path.
    inputs3, target3, weights3, _ = _make_inputs(k_c, 200, 96)
    loss3 = jax.block_until_ready(
        weighted_bce(inputs3, target3, weights3, None, row_tile=80))
    ref3 = _reference(inputs3, target3, weights3, None)
    assert jnp.allclose(loss3, ref3, rtol=1e-5, atol=1e-5), (loss3, ref3)

    print("KERNEL_OK")
</pallas_src>

<mosaic_0001>
module attributes {stable_mosaic.version = 11 : i64} {
  func.func @_wbce_kernel(%arg0: i32, %arg1: i32, %arg2: memref<8x32xf32, #tpu.memory_space<vmem>>, %arg3: memref<8x32xf32, #tpu.memory_space<vmem>>, %arg4: memref<2x32xf32, #tpu.memory_space<vmem>>, %arg5: memref<8x32xf32, #tpu.memory_space<vmem>>) attributes {dimension_semantics = [#tpu.dimension_semantics<parallel>, #tpu.dimension_semantics<arbitrary>], iteration_bounds = array<i64: 1, 1>, scalar_prefetch = 0 : i64, scratch_operands = 0 : i64, tpu.core_type = #tpu.core_type<tc>, window_params = [{transform_indices = @transform_0, window_bounds = array<i64: 8, 32>}, {transform_indices = @transform_1, window_bounds = array<i64: 8, 32>}, {pipeline_mode = #tpu.pipeline_mode<synchronous>, transform_indices = @transform_2, window_bounds = array<i64: 2, 32>}, {transform_indices = @transform_3, window_bounds = array<i64: 8, 32>}]} {
    %c0_i32 = arith.constant 0 : i32
    %0 = arith.cmpi eq, %arg1, %c0_i32 : i32
    %1 = arith.extui %0 : i1 to i32
    %c0_i32_0 = arith.constant 0 : i32
    %2 = arith.cmpi ne, %1, %c0_i32_0 : i32
    scf.if %2 {
      %cst_18 = arith.constant 0.000000e+00 : f32
      %34 = vector.broadcast %cst_18 : f32 to vector<8x32xf32>
      %c0_19 = arith.constant 0 : index
      %c0_20 = arith.constant 0 : index
      %35 = vector.load %arg5[%c0_19, %c0_20] : memref<8x32xf32, #tpu.memory_space<vmem>>, vector<8x32xf32>
      tpu.vector_store %arg5[%c0_19, %c0_20], %34 {strides = array<i32>} : memref<8x32xf32, #tpu.memory_space<vmem>>, vector<8x32xf32>,
    } else {
    }
    %c0 = arith.constant 0 : index
    %c0_1 = arith.constant 0 : index
    %3 = vector.load %arg2[%c0, %c0_1] : memref<8x32xf32, #tpu.memory_space<vmem>>, vector<8x32xf32>
    %c0_2 = arith.constant 0 : index
    %c0_3 = arith.constant 0 : index
    %4 = vector.load %arg3[%c0_2, %c0_3] : memref<8x32xf32, #tpu.memory_space<vmem>>, vector<8x32xf32>
    %c0_4 = arith.constant 0 : index
    %c0_5 = arith.constant 0 : index
    %5 = vector.load %arg4[%c0_4, %c0_5] : memref<2x32xf32, #tpu.memory_space<vmem>>, vector<1x32xf32>
    %c1 = arith.constant 1 : index
    %c0_6 = arith.constant 0 : index
    %6 = vector.load %arg4[%c1, %c0_6] : memref<2x32xf32, #tpu.memory_space<vmem>>, vector<1x32xf32>
    %cst = arith.constant 0.000000e+00 : f32
    %7 = vector.broadcast %cst : f32 to vector<8x32xf32>
    %8 = arith.cmpf oeq, %4, %7 : vector<8x32xf32>
    %cst_7 = arith.constant 0.000000e+00 : f32
    %9 = vector.shape_cast %5 : vector<1x32xf32> to vector<1x32xf32>
    %10 = vector.broadcast %9 : vector<1x32xf32> to vector<8x32xf32>
    %11 = vector.broadcast %cst_7 : f32 to vector<8x32xf32>
    %12 = arith.select %8, %10, %11 : vector<8x32xi1>, vector<8x32xf32>
    %cst_8 = arith.constant 1.000000e+00 : f32
    %13 = vector.broadcast %cst_8 : f32 to vector<8x32xf32>
    %14 = arith.cmpf oeq, %4, %13 : vector<8x32xf32>
    %15 = vector.shape_cast %6 : vector<1x32xf32> to vector<1x32xf32>
    %16 = vector.broadcast %15 : vector<1x32xf32> to vector<8x32xf32>
    %17 = arith.select %14, %16, %12 : vector<8x32xi1>, vector<8x32xf32>
    %cst_9 = arith.constant 1.000000e+00 : f32
    %18 = vector.broadcast %cst_9 : f32 to vector<8x32xf32>
    %19 = arith.cmpf oeq, %4, %18 : vector<8x32xf32>
    %cst_10 = arith.constant 1.000000e+00 : f32
    %20 = vector.broadcast %cst_10 : f32 to vector<8x32xf32>
    %21 = arith.subf %20, %3 : vector<8x32xf32>
    %22 = arith.select %19, %3, %21 : vector<8x32xi1>, vector<8x32xf32>
    %cst_11 = arith.constant 0.000000e+00 : f32
    %23 = vector.broadcast %cst_11 : f32 to vector<8x32xf32>
    %24 = arith.subf %23, %17 : vector<8x32xf32>
    %25 = math.log %22 : vector<8x32xf32>
    %cst_12 = arith.constant -1.000000e+02 : f32
    %26 = vector.broadcast %cst_12 : f32 to vector<8x32xf32>
    %27 = arith.maximumf %25, %26 : vector<8x32xf32>
    %28 = arith.mulf %24, %27 : vector<8x32xf32>
    %c0_13 = arith.constant 0 : index
    %c0_14 = arith.constant 0 : index
    %29 = vector.load %arg5[%c0_13, %c0_14] : memref<8x32xf32, #tpu.memory_space<vmem>>, vector<8x32xf32>
    %30 = vector.shape_cast %28 : vector<8x32xf32> to vector<1x8x32xf32>
    %cst_15 = arith.constant dense<0.000000e+00> : vector<8x32xf32>
    %31 = vector.multi_reduction <add>, %30, %cst_15 [0] : vector<1x8x32xf32> to vector<8x32xf32>
    %32 = arith.addf %29, %31 : vector<8x32xf32>
    %c0_16 = arith.constant 0 : index
    %c0_17 = arith.constant 0 : index
    %33 = vector.load %arg5[%c0_16, %c0_17] : memref<8x32xf32, #tpu.memory_space<vmem>>, vector<8x32xf32>
    tpu.vector_store %arg5[%c0_16, %c0_17], %32 {strides = array<i32>} : memref<8x32xf32, #tpu.memory_space<vmem>>, vector<8x32xf32>,
    return
  }
  func.func @transform_0(%arg0: i32, %arg1: i32) -> (i32, i32) {
    %c1_i32 = arith.constant 1 : i32
    %0 = arith.muli %arg0, %c1_i32 : i32
    %1 = arith.addi %0, %arg1 : i32
    %c0_i32 = arith.constant 0 : i32
    %c0_i32_0 = arith.constant 0 : i32
    return %1, %c0_i32 : i32, i32
  }
  func.func @transform_1(%arg0: i32, %arg1: i32) -> (i32, i32) {
    %c1_i32 = arith.constant 1 : i32
    %0 = arith.muli %arg0, %c1_i32 : i32
    %1 = arith.addi %0, %arg1 : i32
    %c0_i32 = arith.constant 0 : i32
    %c0_i32_0 = arith.constant 0 : i32
    return %1, %c0_i32 : i32, i32
  }
  func.func @transform_2(%arg0: i32, %arg1: i32) -> (i32, i32) {
    %c0_i32 = arith.constant 0 : i32
    %c0_i32_0 = arith.constant 0 : i32
    %c0_i32_1 = arith.constant 0 : i32
    return %c0_i32, %c0_i32_0 : i32, i32
  }
  func.func @transform_3(%arg0: i32, %arg1: i32) -> (i32, i32) {
    %c0_i32 = arith.constant 0 : i32
    %c0_i32_0 = arith.constant 0 : i32
    return %arg0, %c0_i32 : i32, i32
  }
}

</mosaic_0001>

<llo_original>
// kernel: tpu_custom_call.1
$region0: #{tpu_custom_call.1}
  #allocation0 [shape = 'u32[]', space=smem, size = 0x4, offset = 0x4, fixed_abs, tag = 'smem constant byte address 0x4 - core index']
  #allocation1 [shape = 'u32[144,128]{1,0:T(1,128)}', space=vmem, size = 0x12000, scoped, tag = 'internal scratch']
  %s0 = inlined_call_operand.hbm [shape: f32[8,32], index: 0, kind: input, shape index: {}]
  %s1 = inlined_call_operand.hbm [shape: f32[8,32], index: 1, kind: input, shape index: {}]
  %s2 = inlined_call_operand.vmem [shape: f32[2,32], index: 2, kind: input, shape index: {}]
  %s3 = inlined_call_operand.hbm [shape: f32[8,32], index: 3, kind: output, shape index: {}]
  %s4 = sld [smem:[#allocation0]]
  $region34: #{tpu_custom_call.1} parent=0
    _
  %s6 = ssub.s32 1, %s4
  %s7 = scalar_select 0, %s6, %s4
  $region1: #{tpu_custom_call.1} parent=0
    #allocation2 [shape = 'u8[4096]{0}', space=vmem, size = 0x1000, scoped, tag = 'input window, operand 0, single buffered']
    #allocation3 [shape = 's32[1]{0}', space=sflag, size = 0x4, scoped, tag = 'scoped memory for tpu_custom_call.1']
    #allocation4 [shape = 's32[1]{0}', space=sflag, size = 0x4, scoped, tag = 'scoped memory for tpu_custom_call.1']
    #allocation5 [shape = 'u8[4096]{0}', space=vmem, size = 0x1000, scoped, tag = 'input window, operand 1, single buffered']
    #allocation6 [shape = 's32[1]{0}', space=sflag, size = 0x4, scoped, tag = 'scoped memory for tpu_custom_call.1']
    #allocation7 [shape = 'u8[4096]{0}', space=vmem, size = 0x1000, scoped, tag = 'output window, operand 0, single buffered']
    %8 = vsyncpa [#allocation3], 0
    %9 = vsyncpa [#allocation6], 0
    %10 = vsyncpa [#allocation4], 0
    // Predicated region
    $region2: #{tpu_custom_call.1} parent=1 // pred_check
      _
    $region3: #{tpu_custom_call.1} parent=1 // pred_check_branch
      %12 = sbr.rel (0) target = $region5
    $region4: #{tpu_custom_call.1} parent=1 // pred_region
      %s13 = sadd.s32 0, 0
      %s15 = ssub.s32 128, 128
      %16 = vsyncadd [#allocation3], %s15
      %s17 = smul.addr %s13, 128
      %s18 = scalar_lea.hbm %s0, %s17
      %s20 = sshll.u32 [#allocation2], 4
      %s21 = int_to_ptr.vmem [resolvable:$true] %s20
      %23 = dma.hbm_to_vmem [thread:$0]  %s18, 128, %s21, [#allocation3]
    $region5: #{tpu_custom_call.1} parent=1 // pred_fallthru
      _
    // Predicated region
    $region6: #{tpu_custom_call.1} parent=1 // pred_check
      _
    $region7: #{tpu_custom_call.1} parent=1 // pred_check_branch
      %25 = sbr.rel (0) target = $region9
    $region8: #{tpu_custom_call.1} parent=1 // pred_region
      %s26 = sadd.s32 0, 0
      %s28 = ssub.s32 128, 128
      %29 = vsyncadd [#allocation6], %s28
      %s30 = smul.addr %s26, 128
      %s31 = scalar_lea.hbm %s1, %s30
      %s33 = sshll.u32 [#allocation5], 4
      %s34 = int_to_ptr.vmem [resolvable:$true] %s33
      %36 = dma.hbm_to_vmem [thread:$0]  %s31, 128, %s34, [#allocation6]
    $region9: #{tpu_custom_call.1} parent=1 // pred_fallthru
      _
    // Predicated region
    $region10: #{tpu_custom_call.1} parent=1 // pred_check
      _
    $region11: #{tpu_custom_call.1} parent=1 // pred_check_branch
      %38 = sbr.rel (0) target = $region13
    $region12: #{tpu_custom_call.1} parent=1 // pred_region
      _
    $region13: #{tpu_custom_call.1} parent=1 // pred_fallthru
      _
    // Predicated region
    $region14: #{tpu_custom_call.1} parent=1 // pred_check
      _
    $region15: #{tpu_custom_call.1} parent=1 // pred_check_branch
      %40 = sbr.rel (0) target = $region17
    $region16: #{tpu_custom_call.1} parent=1 // pred_region
      %41 = dma.done [#allocation3], 128
    $region17: #{tpu_custom_call.1} parent=1 // pred_fallthru
      _
    // Predicated region
    $region18: #{tpu_custom_call.1} parent=1 // pred_check
      _
    $region19: #{tpu_custom_call.1} parent=1 // pred_check_branch
      %43 = sbr.rel (0) target = $region21
    $region20: #{tpu_custom_call.1} parent=1 // pred_region
      %44 = dma.done [#allocation6], 128
    $region21: #{tpu_custom_call.1} parent=1 // pred_fallthru
      _
    %s45 = sadd.s32 0, 0
    %s46 = sadd.s32 0, 0
    %p47 = scmp.eq.s32.totalorder 0, 0
    // Predicated region
    $region22: #{tpu_custom_call.1} parent=1 // pred_check
      %p48 = pneg %p47
    $region23: #{tpu_custom_call.1} parent=1 // pred_check_branch
      %50 = sbr.rel (%p48) target = $region25
    $region24: #{tpu_custom_call.1} parent=1 // pred_region
      %vm51 = vcmask 261120
      %52 = vst.msk [vmem:[#allocation7] sm:$0xff] %vm51, 0.0
    $region25: #{tpu_custom_call.1} parent=1 // pred_fallthru
      _
    %v53 = vld [vmem:[#allocation2] sm:$0xff]
    %v54 = vld [vmem:[#allocation5] sm:$0xff]
    %v55 = vld [vmem:[%s2] sm:$0x1]
    %v56 = vld [vmem:[%s2 + $0x1] sm:$0x1]
    %vm57 = vcmp.eq.f32.partialorder %v54, 0.0
    %v58 = vlaneseq
    %v59 = vshrl.u32 %v58, 7
    %v60 = vsub.s32 0, %v59
    %v61 = vrot.slane %v55, %v60
    %v62 = vsel %vm57, %v61, 0.0
    %vm63 = vcmp.eq.f32.partialorder %v54, 1.0
    %v64 = vlaneseq
    %v65 = vshrl.u32 %v64, 7
    %v66 = vsub.s32 0, %v65
    %v67 = vrot.slane %v56, %v66
    %v68 = vsel %vm63, %v67, %v62
    %v69 = vsub.f32 1.0, %v53
    %v70 = vsel %vm63, %v53, %v69
    %v71 = vsub.f32 0.0, %v68
    %v72 = vlog2.pop %v70
    %v73 = vmul.f32 %v72, 0.6931472
    %v74 = vmax.f32 %v73, -100.0
    %v75 = vmul.f32 %v71, %v74
    %v76 = vld [vmem:[#allocation7] sm:$0xff]
    %v77 = vadd.f32 %v75, 0.0
    %v78 = vadd.f32 %v76, %v77
    %vm79 = vcmask 261120
    %80 = vst.msk [vmem:[#allocation7] sm:$0xff] %vm79, %v78
    // Predicated region
    $region26: #{tpu_custom_call.1} parent=1 // pred_check
      _
    $region27: #{tpu_custom_call.1} parent=1 // pred_check_branch
      %82 = sbr.rel (0) target = $region29
    $region28: #{tpu_custom_call.1} parent=1 // pred_region
      %s84 = ssub.s32 128, 128
      %85 = vsyncadd [#allocation4], %s84
      %s87 = sshll.u32 [#allocation7], 4
      %s88 = int_to_ptr.vmem [resolvable:$true] %s87
      %90 = dma.vmem_to_hbm [thread:$0]  %s88, 128, %s3, [#allocation4]
    $region29: #{tpu_custom_call.1} parent=1 // pred_fallthru
      _
    // Predicated region
    $region30: #{tpu_custom_call.1} parent=1 // pred_check
      _
    $region31: #{tpu_custom_call.1} parent=1 // pred_check_branch
      %92 = sbr.rel (0) target = $region33
    $region32: #{tpu_custom_call.1} parent=1 // pred_region
      %93 = dma.done [#allocation4], 128
    $region33: #{tpu_custom_call.1} parent=1 // pred_fallthru
      _
    %94 = vsyncpa [#allocation3], 1
    %95 = vsyncpa [#allocation6], 1
    %96 = vsyncpa [#allocation4], 1

</llo_original>
